<compile_context>
chip_gen: v5e
topology: v5e:2x2
jax: 0.10.0
libtpu: 0.0.40
codegen_flags: <defaults>
</compile_context>

<pallas_src>
import jax
import jax.numpy as jnp
from jax.experimental import pallas as pl
from jax.experimental.pallas import tpu as pltpu


def linear_sub_kernel(x_ref, wb_ref, x2_ref, o_ref):
    # x:  (M, K)   VMEM
    # wb: (K+1, N) VMEM  -- rows [0:K] = W^T, row [K] = bias
    # x2: (1,)     SMEM scalar
    x = x_ref[...]                           # (M, K)
    K = x.shape[1]

    wb = wb_ref[...]                         # (K+1, N) -- fits in one vreg tile
    wT = wb[:K, :]                           # (K, N)
    b = wb[K:K + 1, :]                       # (1, N)

    x2 = x2_ref[0]                           # scalar read from SMEM (cheap)

    # Fold the broadcast subtract into the bias once: a single (1, N) op
    # instead of a second (M, N) broadcast subtract.
    b_fold = b - x2                          # (1, N)

    # One padded MXU pass (f32 accumulation), latency hidden under the
    # output writeback; cheaper in bundles than the per-k broadcast MAC.
    acc = jnp.dot(x, wT, preferred_element_type=jnp.float32)   # (M, N)

    o_ref[...] = (acc + b_fold).astype(o_ref.dtype)


def prepare_params(weight, bias):
    """One-time layout work for the static Linear params (outside hot path).

    weight: torch-style (out_features, in_features) = (N, K)
    bias:   (N,)
    Returns a single packed (K+1, N) array: rows [0:K] = W^T, row [K] = bias.
    """
    wT = jnp.asarray(weight).T                       # (K, N)
    b = jnp.asarray(bias).reshape(1, -1)             # (1, N)
    return jnp.concatenate([wT, b], axis=0)          # (K+1, N)


@jax.jit
def model_forward(x1, wb, x2):
    """x1: (M, K), wb: (K+1, N) packed [W^T; b], x2: (1,) -> (M, N)."""
    M, K = x1.shape
    N = wb.shape[1]
    cost = pl.CostEstimate(
        flops=2 * M * N * K,
        bytes_accessed=(M * K + (K + 1) * N + 1 + M * N) * 4,
        transcendentals=0,
    )
    return pl.pallas_call(
        linear_sub_kernel,
        out_shape=jax.ShapeDtypeStruct((M, N), x1.dtype),
        in_specs=[
            pl.BlockSpec(memory_space=pltpu.MemorySpace.VMEM),   # x1
            pl.BlockSpec(memory_space=pltpu.MemorySpace.VMEM),   # packed [W^T; b]
            pl.BlockSpec(memory_space=pltpu.MemorySpace.SMEM),   # x2 scalar
        ],
        out_specs=pl.BlockSpec(memory_space=pltpu.MemorySpace.VMEM),
        cost_estimate=cost,
    )(x1, wb, x2)


if __name__ == "__main__":
    key = jax.random.PRNGKey(0)
    k1, k2, k3, k4 = jax.random.split(key, 4)

    M, K, N = 3, 4, 6

    # Inputs (match torch: x1 = randn(3, 4); x2 = randn(1)).
    x1 = jax.random.normal(k1, (M, K), dtype=jnp.float32)
    x2 = jax.random.normal(k2, (1,), dtype=jnp.float32)

    # Deterministic Linear(4, 6) params (torch-style weight shape (out, in)).
    bound = 1.0 / (K ** 0.5)
    weight = jax.random.uniform(k3, (N, K), minval=-bound, maxval=bound,
                                dtype=jnp.float32)
    bias = jax.random.uniform(k4, (N,), minval=-bound, maxval=bound,
                              dtype=jnp.float32)

    # One-time param preparation: pack W^T and bias into one operand.
    wb = prepare_params(weight, bias)

    out = model_forward(x1, wb, x2)
    out = jax.block_until_ready(out)

    # Reference check in plain JAX.
    ref = x1 @ weight.T + bias - x2
    assert out.shape == (M, N)
    assert jnp.allclose(out, ref, atol=1e-5, rtol=1e-5)

    print("KERNEL_OK")
</pallas_src>

<mosaic_0001>
module attributes {stable_mosaic.version = 11 : i64} {
  func.func @linear_sub_kernel(%arg0: memref<3x4xf32, #tpu.memory_space<vmem>>, %arg1: memref<5x6xf32, #tpu.memory_space<vmem>>, %arg2: memref<1xf32, #tpu.memory_space<smem>>, %arg3: memref<3x6xf32, #tpu.memory_space<vmem>>) attributes {dimension_semantics = [], scalar_prefetch = 0 : i64, scratch_operands = 0 : i64, tpu.core_type = #tpu.core_type<tc>} {
    %c0 = arith.constant 0 : index
    %c0_0 = arith.constant 0 : index
    %0 = vector.load %arg0[%c0, %c0_0] : memref<3x4xf32, #tpu.memory_space<vmem>>, vector<3x4xf32>
    %c0_1 = arith.constant 0 : index
    %c0_2 = arith.constant 0 : index
    %1 = vector.load %arg1[%c0_1, %c0_2] : memref<5x6xf32, #tpu.memory_space<vmem>>, vector<5x6xf32>
    %2 = vector.extract_strided_slice %1 {offsets = [0, 0], sizes = [4, 6], strides = [1, 1]} : vector<5x6xf32> to vector<4x6xf32>
    %3 = vector.extract_strided_slice %1 {offsets = [4, 0], sizes = [1, 6], strides = [1, 1]} : vector<5x6xf32> to vector<1x6xf32>
    %c0_3 = arith.constant 0 : index
    %4 = memref.load %arg2[%c0_3] : memref<1xf32, #tpu.memory_space<smem>>
    %5 = vector.broadcast %4 : f32 to vector<1x6xf32>
    %6 = arith.subf %3, %5 : vector<1x6xf32>
    %cst = arith.constant dense<0.000000e+00> : vector<3x6xf32>
    %7 = tpu.matmul %0, %2, %cst {dimension_numbers = #tpu.dot_dimension_numbers<[1], [0], [0], [1], [0, 0, 1, 1], [], []>} : vector<3x4xf32>, vector<4x6xf32>, vector<3x6xf32> -> vector<3x6xf32>
    %8 = vector.broadcast %6 : vector<1x6xf32> to vector<3x6xf32>
    %9 = arith.addf %7, %8 : vector<3x6xf32>
    %c0_4 = arith.constant 0 : index
    %c0_5 = arith.constant 0 : index
    %10 = vector.load %arg3[%c0_4, %c0_5] : memref<3x6xf32, #tpu.memory_space<vmem>>, vector<3x6xf32>
    tpu.vector_store %arg3[%c0_4, %c0_5], %9 {strides = array<i32>} : memref<3x6xf32, #tpu.memory_space<vmem>>, vector<3x6xf32>,
    return
  }
}

</mosaic_0001>

<llo_original>
// kernel: model_forward.1
$region0: #{model_forward.1}
  #allocation0 [shape = 'u32[]', space=smem, size = 0x4, offset = 0x4, fixed_abs, tag = 'smem constant byte address 0x4 - core index']
  #allocation1 [shape = 'u32[72,128]{1,0:T(1,128)}', space=vmem, size = 0x9000, scoped, tag = 'internal scratch']
  #allocation2 [shape = 'f32[1]{0:T(128)S(6)}', space=smem, size = 0x200, scoped, tag = 'scoped memory for model_forward.1']
  %s0 = inlined_call_operand.hbm [shape: f32[3,4], index: 0, kind: input, shape index: {}]
  %s1 = inlined_call_operand.hbm [shape: f32[5,6], index: 1, kind: input, shape index: {}]
  %s2 = inlined_call_operand.<no memory space> [shape: f32[1], index: 2, kind: input, shape index: {}]
  %s3 = inlined_call_operand.hbm [shape: f32[3,6], index: 3, kind: output, shape index: {}]
  %s4 = sld [smem:[#allocation0]]
  $region30: #{model_forward.1} parent=0
    _
  %s6 = ssub.s32 1, %s4
  %s7 = scalar_select 0, %s6, %s4
  %8 = sst [smem:[#allocation2]] %s2
  $region1: #{model_forward.1} parent=0
    #allocation3 [shape = 'u8[2048]{0}', space=vmem, size = 0x800, scoped, tag = 'input window, operand 0, single buffered']
    #allocation4 [shape = 's32[1]{0}', space=sflag, size = 0x4, scoped, tag = 'scoped memory for model_forward.1']
    #allocation5 [shape = 's32[1]{0}', space=sflag, size = 0x4, scoped, tag = 'scoped memory for model_forward.1']
    #allocation6 [shape = 'u8[4096]{0}', space=vmem, size = 0x1000, scoped, tag = 'input window, operand 1, single buffered']
    #allocation7 [shape = 's32[1]{0}', space=sflag, size = 0x4, scoped, tag = 'scoped memory for model_forward.1']
    #allocation8 [shape = 'u8[2048]{0}', space=vmem, size = 0x800, scoped, tag = 'output window, operand 0, single buffered']
    %9 = vsyncpa [#allocation4], 0
    %10 = vsyncpa [#allocation7], 0
    %11 = vsyncpa [#allocation5], 0
    // Predicated region
    $region2: #{model_forward.1} parent=1 // pred_check
      _
    $region3: #{model_forward.1} parent=1 // pred_check_branch
      %13 = sbr.rel (0) target = $region5
    $region4: #{model_forward.1} parent=1 // pred_region
      %15 = vsyncadd [#allocation4], 0
      %s17 = sshll.u32 %s0, 4
      %s18 = int_to_ptr.hbm [resolvable:$true] %s17
      %s19 = sshll.u32 [#allocation3], 4
      %s20 = int_to_ptr.vmem [resolvable:$true] %s19
      %22 = dma.hbm_to_vmem [thread:$0]  %s18, 64, %s20, [#allocation4]
    $region5: #{model_forward.1} parent=1 // pred_fallthru
      _
    // Predicated region
    $region6: #{model_forward.1} parent=1 // pred_check
      _
    $region7: #{model_forward.1} parent=1 // pred_check_branch
      %24 = sbr.rel (0) target = $region9
    $region8: #{model_forward.1} parent=1 // pred_region
      %26 = vsyncadd [#allocation7], 0
      %s28 = sshll.u32 %s1, 4
      %s29 = int_to_ptr.hbm [resolvable:$true] %s28
      %s30 = sshll.u32 [#allocation6], 4
      %s31 = int_to_ptr.vmem [resolvable:$true] %s30
      %33 = dma.hbm_to_vmem [thread:$0]  %s29, 128, %s31, [#allocation7]
    $region9: #{model_forward.1} parent=1 // pred_fallthru
      _
    // Predicated region
    $region10: #{model_forward.1} parent=1 // pred_check
      _
    $region11: #{model_forward.1} parent=1 // pred_check_branch
      %35 = sbr.rel (0) target = $region13
    $region12: #{model_forward.1} parent=1 // pred_region
      _
    $region13: #{model_forward.1} parent=1 // pred_fallthru
      _
    // Predicated region
    $region14: #{model_forward.1} parent=1 // pred_check
      _
    $region15: #{model_forward.1} parent=1 // pred_check_branch
      %37 = sbr.rel (0) target = $region17
    $region16: #{model_forward.1} parent=1 // pred_region
      %39 = dma.done [#allocation4], 64
    $region17: #{model_forward.1} parent=1 // pred_fallthru
      _
    // Predicated region
    $region18: #{model_forward.1} parent=1 // pred_check
      _
    $region19: #{model_forward.1} parent=1 // pred_check_branch
      %41 = sbr.rel (0) target = $region21
    $region20: #{model_forward.1} parent=1 // pred_region
      %43 = dma.done [#allocation7], 128
    $region21: #{model_forward.1} parent=1 // pred_fallthru
      _
    %v44 = vld [vmem:[#allocation3] sm:$0x7]
    %v45 = vld [vmem:[#allocation6] sm:$0x1f]
    %s46 = sld [smem:[#allocation2]]
    %v47 = vstv %s46
    %v48 = vsub.f32 %v45, %v47
    %v49 = vperm.slane %v48, 4
    %vm50 = vcmask 31744
    %v52 = vsel %vm50, %v44, 0
    %vm54 = vcmask 1043456
    %v56 = vsel %vm54, %v45, 0
    %58 = vmatpush.msra.mxu0 0.0
    %59 = vmatpush.msra.mxu0 0.0
    %60 = vmatpush.msra.mxu0 0.0
    %61 = vmatpush.msra.mxu0 0.0
    %62 = vmatpush.msra.mxu0 0.0
    %63 = vmatpush.msra.mxu0 0.0
    %64 = vmatpush.msra.mxu0 0.0
    %65 = vmatpush.msra.mxu0 0.0
    %66 = vmatpush.msra.mxu0 0.0
    %67 = vmatpush.msra.mxu0 0.0
    %68 = vmatpush.msra.mxu0 0.0
    %69 = vmatpush.msra.mxu0 0.0
    %70 = vmatpush.msra.mxu0 0.0
    %71 = vmatpush.msra.mxu0 0.0
    %72 = vmatpush.msra.mxu0 0.0
    %73 = vmatpush.msra.mxu0 %v56
    %74 = vmatmul.f32.gmra.mxu0 %v52
    %v75 = vpop.f32.mrf.mxu0
    %v76 = vadd.f32 %v49, %v75
    %77 = vdwg.mxu0
    %vm78 = vcmask 43008
    %79 = vst.msk [vmem:[#allocation8] sm:$0x7] %vm78, %v76
    // Predicated region
    $region22: #{model_forward.1} parent=1 // pred_check
      _
    $region23: #{model_forward.1} parent=1 // pred_check_branch
      %81 = sbr.rel (0) target = $region25
    $region24: #{model_forward.1} parent=1 // pred_region
      %83 = vsyncadd [#allocation5], 0
      %s85 = sshll.u32 [#allocation8], 4
      %s86 = int_to_ptr.vmem [resolvable:$true] %s85
      %s87 = sshll.u32 %s3, 4
      %s88 = int_to_ptr.hbm [resolvable:$true] %s87
      %90 = dma.vmem_to_hbm [thread:$0]  %s86, 64, %s88, [#allocation5]
    $region25: #{model_forward.1} parent=1 // pred_fallthru
      _
    // Predicated region
    $region26: #{model_forward.1} parent=1 // pred_check
      _
    $region27: #{model_forward.1} parent=1 // pred_check_branch
      %92 = sbr.rel (0) target = $region29
    $region28: #{model_forward.1} parent=1 // pred_region
      %94 = dma.done [#allocation5], 64
    $region29: #{model_forward.1} parent=1 // pred_fallthru
      _
    %95 = vsyncpa [#allocation4], 1
    %96 = vsyncpa [#allocation7], 1
    %97 = vsyncpa [#allocation5], 1

</llo_original>
